<compile_context>
chip_gen: v7x
topology: tpu7x:2x2x1
jax: 0.10.0
libtpu: 0.0.40
codegen_flags: <defaults>
</compile_context>

<pallas_src>
import jax
import jax.numpy as jnp
from jax.experimental import pallas as pl
from jax.experimental.pallas import tpu as pltpu


def _make_bev_conv_kernel(BB, H, W, Cin):
    """Returns a kernel closed over the static geometry."""

    def kernel(x_ref, w_ref, b_ref, o_ref):
        # x_ref: (BB, H+2, (W+2)*Cin) bf16  padded, lane-flattened NHWC rows
        # w_ref: (9*W*Cin, W*Cout)    bf16  block-structured conv weights
        # b_ref: (1, W*Cout)          f32   bias tiled over W
        # o_ref: (BB, H, W*Cout)      f32   lane-dense output
        w_mat = w_ref[...]
        b_row = b_ref[...]
        for b in range(BB):                       # static unroll, BB is tiny
            xb = x_ref[b].astype(jnp.float32)     # (H+2, (W+2)*Cin)
            # In-kernel im2col: 9 statically-offset windows; each tap is
            # exactly W*Cin = 128 lanes wide, so the concat is lane-aligned.
            taps = [xb[kh:kh + H, kw * Cin:(kw + W) * Cin]
                    for kh in range(3) for kw in range(3)]
            lhs = jnp.concatenate(taps, axis=-1).astype(jnp.bfloat16)
            acc = jnp.dot(lhs, w_mat, preferred_element_type=jnp.float32)
            o_ref[b] = jnp.maximum(acc + b_row, 0.0).astype(o_ref.dtype)

    return kernel


def prepare_bev_conv_params(weight, bias, W):
    """Build the kernel's weight operands ONCE (they depend only on the static
    conv parameters, not on activations) -- do NOT rebuild these per call.

    Returns:
      big_w:     (9*W*Cin, W*Cout) bf16 -- per-tap (Cin, Cout) weights expanded
                 block-diagonally over W so a single matmul against tap-major
                 im2col rows yields a lane-dense (.., W*Cout) output.
      bias_wide: (1, W*Cout) f32 -- bias tiled over W.
    """
    Cout, Cin, KH, KW = weight.shape
    w_tap = jnp.transpose(weight, (2, 3, 1, 0)).reshape(KH * KW, Cin, Cout)
    eye_w = jnp.eye(W, dtype=weight.dtype)
    big_w = jnp.einsum("vw,tio->tviwo", eye_w, w_tap)
    big_w = big_w.reshape(KH * KW * W * Cin, W * Cout).astype(jnp.bfloat16)
    bias_wide = jnp.tile(bias.astype(jnp.float32), W).reshape(1, W * Cout)
    return big_w, bias_wide


def bev_conv_forward(x_nchw, big_w, bias_wide, *, num_blocks=2):
    """x_nchw: (B, Cin, H, W); big_w/bias_wide from prepare_bev_conv_params."""
    B, Cin, H, W = x_nchw.shape
    Cout = bias_wide.shape[-1] // W
    K = 9 * Cin

    # Fold the batch into the matmul M dimension; the grid is a fixed number
    # of batch-blocks (2 -> one "parallel" step per v7x TensorCore; use 1 on
    # single-TC v5e/v6e to save one ~0.35us grid step).
    if num_blocks < 1 or B % num_blocks != 0:
        num_blocks = 1
    BB = B // num_blocks

    # Tiny wrapper-side prep: NCHW -> NHWC, cast bf16, pad by 1, flatten
    # (W+2, Cin) into the lane axis.  The 9-tap im2col happens in-kernel.
    x_nhwc = jnp.transpose(x_nchw, (0, 2, 3, 1)).astype(jnp.bfloat16)
    x_pad = jnp.pad(x_nhwc, ((0, 0), (1, 1), (1, 1), (0, 0)))
    x_flat = x_pad.reshape(B, H + 2, (W + 2) * Cin)

    kernel = _make_bev_conv_kernel(BB, H, W, Cin)

    out_flat = pl.pallas_call(
        kernel,
        out_shape=jax.ShapeDtypeStruct((B, H, W * Cout), jnp.float32),
        grid_spec=pltpu.PrefetchScalarGridSpec(
            num_scalar_prefetch=0,
            grid=(num_blocks,),
            in_specs=[
                pl.BlockSpec((BB, H + 2, (W + 2) * Cin), lambda i: (i, 0, 0)),
                # Weights / bias: same block every step -> DMA'd once,
                # VMEM-resident across the whole grid.
                pl.BlockSpec((K * W, W * Cout), lambda i: (0, 0)),
                pl.BlockSpec((1, W * Cout), lambda i: (0, 0)),
            ],
            out_specs=pl.BlockSpec((BB, H, W * Cout), lambda i: (i, 0, 0)),
        ),
        compiler_params=pltpu.CompilerParams(
            dimension_semantics=("parallel",)),
    )(x_flat, big_w, bias_wide)

    # Lane-dense (B, H, W*Cout) -> NCHW to match the PyTorch module.
    out_nhwc = out_flat.reshape(B, H, W, Cout)
    return jnp.transpose(out_nhwc, (0, 3, 1, 2)).astype(x_nchw.dtype)


def _reference(x_nchw, weight, bias):
    # Pure-JAX reference: conv2d (NCHW, OIHW, pad=1) + ReLU.
    y = jax.lax.conv_general_dilated(
        x_nchw, weight, window_strides=(1, 1), padding=((1, 1), (1, 1)),
        dimension_numbers=("NCHW", "OIHW", "NCHW"))
    return jnp.maximum(y + bias.reshape(1, -1, 1, 1), 0.0)


if __name__ == "__main__":
    # Module dims: bev_dim=4, ego_dim=4 -> Cin=8; fused_dim=8 -> Cout=8.
    bev_dim, ego_dim, fused_dim = 4, 4, 8
    B, H, W = 2, 16, 16
    Cin = bev_dim + ego_dim

    key = jax.random.PRNGKey(0)
    kx, kw_key, kb = jax.random.split(key, 3)
    x = jax.random.normal(kx, (B, Cin, H, W), dtype=jnp.float32)
    # Deterministic synthetic parameters (Conv2d(Cin, Cout, 3, padding=1)).
    fan_in = Cin * 3 * 3
    bound = 1.0 / (fan_in ** 0.5)
    weight = jax.random.uniform(kw_key, (fused_dim, Cin, 3, 3),
                                minval=-bound, maxval=bound, dtype=jnp.float32)
    bias = jax.random.uniform(kb, (fused_dim,),
                              minval=-bound, maxval=bound, dtype=jnp.float32)

    # Built once, outside the per-call path (perf review item #1).
    big_w, bias_wide = jax.block_until_ready(
        prepare_bev_conv_params(weight, bias, W))

    out = jax.block_until_ready(bev_conv_forward(x, big_w, bias_wide))

    # Reference #1: same bf16-rounded inputs (tight check of the kernel math).
    xb = x.astype(jnp.bfloat16).astype(jnp.float32)
    wb = weight.astype(jnp.bfloat16).astype(jnp.float32)
    ref_bf16 = jax.block_until_ready(_reference(xb, wb, bias))
    # Reference #2: full-f32 module semantics (loose check of bf16 cast error).
    ref_f32 = jax.block_until_ready(_reference(x, weight, bias))

    assert out.shape == (B, fused_dim, H, W), out.shape
    assert jnp.max(jnp.abs(out - ref_bf16)) < 2e-3
    assert jnp.max(jnp.abs(out - ref_f32)) < 5e-2
    print("KERNEL_OK")
</pallas_src>

<mosaic_0001>
module attributes {stable_mosaic.version = 11 : i64} {
  func.func @kernel(%arg0: i32, %arg1: memref<1x18x144xbf16, #tpu.memory_space<vmem>>, %arg2: memref<1152x128xbf16, #tpu.memory_space<vmem>>, %arg3: memref<1x128xf32, #tpu.memory_space<vmem>>, %arg4: memref<1x16x128xf32, #tpu.memory_space<vmem>>) attributes {dimension_semantics = [#tpu.dimension_semantics<parallel>], iteration_bounds = array<i64: 2>, scalar_prefetch = 0 : i64, scratch_operands = 0 : i64, tpu.core_type = #tpu.core_type<tc>, window_params = [{transform_indices = @transform_0, window_bounds = array<i64: 1, 18, 144>}, {pipeline_mode = #tpu.pipeline_mode<synchronous>, transform_indices = @transform_1, window_bounds = array<i64: 1152, 128>}, {pipeline_mode = #tpu.pipeline_mode<synchronous>, transform_indices = @transform_2, window_bounds = array<i64: 1, 128>}, {transform_indices = @transform_3, window_bounds = array<i64: 1, 16, 128>}]} {
    %c0 = arith.constant 0 : index
    %c0_0 = arith.constant 0 : index
    %0 = vector.load %arg2[%c0, %c0_0] : memref<1152x128xbf16, #tpu.memory_space<vmem>>, vector<1152x128xbf16>
    %c0_1 = arith.constant 0 : index
    %c0_2 = arith.constant 0 : index
    %1 = vector.load %arg3[%c0_1, %c0_2] : memref<1x128xf32, #tpu.memory_space<vmem>>, vector<1x128xf32>
    %c0_3 = arith.constant 0 : index
    %c0_4 = arith.constant 0 : index
    %c0_5 = arith.constant 0 : index
    %2 = vector.load %arg1[%c0_3, %c0_4, %c0_5] : memref<1x18x144xbf16, #tpu.memory_space<vmem>>, vector<1x18x144xbf16>
    %3 = vector.shape_cast %2 : vector<1x18x144xbf16> to vector<18x144xbf16>
    %4 = arith.extf %3 : vector<18x144xbf16> to vector<18x144xf32>
    %5 = vector.extract_strided_slice %4 {offsets = [0, 0], sizes = [16, 128], strides = [1, 1]} : vector<18x144xf32> to vector<16x128xf32>
    %6 = vector.extract_strided_slice %4 {offsets = [0, 8], sizes = [16, 128], strides = [1, 1]} : vector<18x144xf32> to vector<16x128xf32>
    %7 = vector.extract_strided_slice %4 {offsets = [0, 16], sizes = [16, 128], strides = [1, 1]} : vector<18x144xf32> to vector<16x128xf32>
    %8 = vector.extract_strided_slice %4 {offsets = [1, 0], sizes = [16, 128], strides = [1, 1]} : vector<18x144xf32> to vector<16x128xf32>
    %9 = vector.extract_strided_slice %4 {offsets = [1, 8], sizes = [16, 128], strides = [1, 1]} : vector<18x144xf32> to vector<16x128xf32>
    %10 = vector.extract_strided_slice %4 {offsets = [1, 16], sizes = [16, 128], strides = [1, 1]} : vector<18x144xf32> to vector<16x128xf32>
    %11 = vector.extract_strided_slice %4 {offsets = [2, 0], sizes = [16, 128], strides = [1, 1]} : vector<18x144xf32> to vector<16x128xf32>
    %12 = vector.extract_strided_slice %4 {offsets = [2, 8], sizes = [16, 128], strides = [1, 1]} : vector<18x144xf32> to vector<16x128xf32>
    %13 = vector.extract_strided_slice %4 {offsets = [2, 16], sizes = [16, 128], strides = [1, 1]} : vector<18x144xf32> to vector<16x128xf32>
    %14 = tpu.concatenate %5, %6, %7, %8, %9, %10, %11, %12, %13 in 1 : vector<16x128xf32>, vector<16x128xf32>, vector<16x128xf32>, vector<16x128xf32>, vector<16x128xf32>, vector<16x128xf32>, vector<16x128xf32>, vector<16x128xf32>, vector<16x128xf32> -> vector<16x1152xf32>
    %15 = arith.truncf %14 : vector<16x1152xf32> to vector<16x1152xbf16>
    %cst = arith.constant dense<0.000000e+00> : vector<16x128xf32>
    %16 = tpu.matmul %15, %0, %cst {dimension_numbers = #tpu.dot_dimension_numbers<[1], [0], [0], [1], [0, 0, 1, 1], [], []>} : vector<16x1152xbf16>, vector<1152x128xbf16>, vector<16x128xf32> -> vector<16x128xf32>
    %17 = vector.broadcast %1 : vector<1x128xf32> to vector<16x128xf32>
    %18 = arith.addf %16, %17 : vector<16x128xf32>
    %cst_6 = arith.constant 0.000000e+00 : f32
    %19 = vector.broadcast %cst_6 : f32 to vector<16x128xf32>
    %20 = arith.maximumf %18, %19 : vector<16x128xf32>
    %c0_7 = arith.constant 0 : index
    %c0_8 = arith.constant 0 : index
    %c0_9 = arith.constant 0 : index
    %21 = vector.load %arg4[%c0_7, %c0_8, %c0_9] : memref<1x16x128xf32, #tpu.memory_space<vmem>>, vector<1x16x128xf32>
    %22 = vector.shape_cast %21 : vector<1x16x128xf32> to vector<16x128xf32>
    %23 = vector.shape_cast %20 : vector<16x128xf32> to vector<1x16x128xf32>
    tpu.vector_store %arg4[%c0_7, %c0_8, %c0_9], %23 {strides = array<i32>} : memref<1x16x128xf32, #tpu.memory_space<vmem>>, vector<1x16x128xf32>,
    return
  }
  func.func @transform_0(%arg0: i32) -> (i32, i32, i32) {
    %c0_i32 = arith.constant 0 : i32
    %c0_i32_0 = arith.constant 0 : i32
    %c0_i32_1 = arith.constant 0 : i32
    return %arg0, %c0_i32, %c0_i32_0 : i32, i32, i32
  }
  func.func @transform_1(%arg0: i32) -> (i32, i32) {
    %c0_i32 = arith.constant 0 : i32
    %c0_i32_0 = arith.constant 0 : i32
    %c0_i32_1 = arith.constant 0 : i32
    return %c0_i32, %c0_i32_0 : i32, i32
  }
  func.func @transform_2(%arg0: i32) -> (i32, i32) {
    %c0_i32 = arith.constant 0 : i32
    %c0_i32_0 = arith.constant 0 : i32
    %c0_i32_1 = arith.constant 0 : i32
    return %c0_i32, %c0_i32_0 : i32, i32
  }
  func.func @transform_3(%arg0: i32) -> (i32, i32, i32) {
    %c0_i32 = arith.constant 0 : i32
    %c0_i32_0 = arith.constant 0 : i32
    %c0_i32_1 = arith.constant 0 : i32
    return %arg0, %c0_i32, %c0_i32_0 : i32, i32, i32
  }
}

</mosaic_0001>

<llo_original>
// kernel: tpu_custom_call.1
$region0: #{tpu_custom_call.1}
  #allocation0 [shape = 'u32[]', space=smem, size = 0x4, offset = 0x4, fixed_abs, tag = 'smem constant byte address 0x4 - core index']
  #allocation1 [shape = 'u32[144,128]{1,0:T(1,128)}', space=vmem, size = 0x12000, scoped, tag = 'internal scratch']
  %s0 = inlined_call_operand.vmem [shape: bf16[2,18,144], index: 0, kind: input, shape index: {}]
  %s1 = inlined_call_operand.hbm [shape: bf16[1152,128], index: 1, kind: input, shape index: {}]
  %s2 = inlined_call_operand.vmem [shape: f32[1,128], index: 2, kind: input, shape index: {}]
  %s3 = inlined_call_operand.hbm [shape: f32[2,16,128], index: 3, kind: output, shape index: {}]
  %s4 = sld [smem:[#allocation0]]
  $region49: #{tpu_custom_call.1} parent=0
    _
  %s6 = ssub.s32 1, %s4
  %s7 = scalar_select 0, %s6, %s4
  $region1: #{tpu_custom_call.1} parent=0
    #allocation2 [shape = 'u8[294912]{0}', space=vmem, size = 0x48000, scoped, tag = 'input window, operand 1, single buffered']
    #allocation3 [shape = 's32[2]{0}', space=sflag, size = 0x8, scoped, tag = 'scoped memory for tpu_custom_call.1']
    #allocation4 [shape = 's32[2]{0}', space=sflag, size = 0x8, scoped, tag = 'scoped memory for tpu_custom_call.1']
    #allocation5 [shape = 'u8[16384]{0}', space=vmem, size = 0x4000, scoped, tag = 'output window, operand 0']
    %8 = vsyncpa [#allocation3], 0
    %9 = vsyncpa [#allocation4], 0
    %s10 = scalar_lea.sflag [#allocation4], 1
    %11 = vsyncpa %s10, 0
    loop: start=0, step=1, limit=4
    $region2: #{tpu_custom_call.1} parent=1 // loop_pre_header
      _
    $region3: #{tpu_custom_call.1} parent=1 // loop_header
      %s13 = sphi 0, %s17
      %p14 = scmp.ge.s32.totalorder %s13, 4
      %s23 = sphi 0, %s25
      %s26 = sphi 0, %s23
      %s27 = sphi 0, %s26
      %s43 = sphi 0, %s27
      %s47 = sphi 0, %s47
      %s49 = sphi 0, %s47
      %s50 = sphi 0, %s49
      %s64 = sphi 0, %s50
      %s68 = sphi 0, %s68
      %s70 = sphi 0, %s68
      %s71 = sphi 0, %s70
      %s85 = sphi 0, %s71
      %s91 = sphi 0, %s93
      %s94 = sphi 0, %s91
      %s95 = sphi 0, %s94
      %s111 = sphi 0, %s95
    $region4: #{tpu_custom_call.1} parent=1 // loop_header_branch
      %16 = sbr.rel (%p14) target = $region8
    $region5: #{tpu_custom_call.1} parent=1 // loop_body
      %s18 = ssub.s32 %s13, 1
      %s19 = ssub.s32 %s13, 2
      %s20 = sadd.s32 %s13, 1
      %s21 = ssub.s32 %s13, %s20
      %p22 = scmp.eq.s32.totalorder %s21, 0
      %s24 = sadd.s32 %s23, 1
      %s25 = scalar_select %p22, %s23, %s24
      %p28 = pneg %p22
      %p29 = scmp.eq.s32.totalorder %s13, 1
      %p30 = por %p28, %p29
      %p31 = scmp.ne.s32.totalorder %s23, %s26
      %p32 = scmp.eq.s32.totalorder %s13, 0
      %p33 = por %p31, %p32
      %p34 = scmp.ne.s32.totalorder %s23, %s26
      %p35 = scmp.eq.s32.totalorder %s18, 1
      %p36 = por %p34, %p35
      %p37 = scmp.ne.s32.totalorder %s26, %s27
      %p38 = scmp.eq.s32.totalorder %s18, 0
      %p39 = por %p37, %p38
      %p40 = scmp.ne.s32.totalorder %s26, %s27
      %p41 = scmp.eq.s32.totalorder %s19, 1
      %p42 = por %p40, %p41
      %p44 = scmp.ne.s32.totalorder %s27, %s43
      %p45 = scmp.eq.s32.totalorder %s19, 0
      %p46 = por %p44, %p45
      %s48 = sadd.s32 %s47, 1
      %p51 = scmp.eq.s32.totalorder %s13, 1
      %p52 = scmp.ne.s32.totalorder %s47, %s49
      %p53 = scmp.eq.s32.totalorder %s13, 0
      %p54 = por %p52, %p53
      %p55 = scmp.ne.s32.totalorder %s47, %s49
      %p56 = scmp.eq.s32.totalorder %s18, 1
      %p57 = por %p55, %p56
      %p58 = scmp.ne.s32.totalorder %s49, %s50
      %p59 = scmp.eq.s32.totalorder %s18, 0
      %p60 = por %p58, %p59
      %p61 = scmp.ne.s32.totalorder %s49, %s50
      %p62 = scmp.eq.s32.totalorder %s19, 1
      %p63 = por %p61, %p62
      %p65 = scmp.ne.s32.totalorder %s50, %s64
      %p66 = scmp.eq.s32.totalorder %s19, 0
      %p67 = por %p65, %p66
      %s69 = sadd.s32 %s68, 1
      %p72 = scmp.eq.s32.totalorder %s13, 1
      %p73 = scmp.ne.s32.totalorder %s68, %s70
      %p74 = scmp.eq.s32.totalorder %s13, 0
      %p75 = por %p73, %p74
      %p76 = scmp.ne.s32.totalorder %s68, %s70
      %p77 = scmp.eq.s32.totalorder %s18, 1
      %p78 = por %p76, %p77
      %p79 = scmp.ne.s32.totalorder %s70, %s71
      %p80 = scmp.eq.s32.totalorder %s18, 0
      %p81 = por %p79, %p80
      %p82 = scmp.ne.s32.totalorder %s70, %s71
      %p83 = scmp.eq.s32.totalorder %s19, 1
      %p84 = por %p82, %p83
      %p86 = scmp.ne.s32.totalorder %s71, %s85
      %p87 = scmp.eq.s32.totalorder %s19, 0
      %p88 = por %p86, %p87
      %s89 = ssub.s32 %s13, %s20
      %p90 = scmp.eq.s32.totalorder %s89, 0
      %s92 = sadd.s32 %s91, 1
      %s93 = scalar_select %p90, %s91, %s92
      %p96 = pneg %p90
      %p97 = scmp.eq.s32.totalorder %s13, 1
      %p98 = por %p96, %p97
      %p99 = scmp.ne.s32.totalorder %s91, %s94
      %p100 = scmp.eq.s32.totalorder %s13, 0
      %p101 = por %p99, %p100
      %p102 = scmp.ne.s32.totalorder %s91, %s94
      %p103 = scmp.eq.s32.totalorder %s18, 1
      %p104 = por %p102, %p103
      %p105 = scmp.ne.s32.totalorder %s94, %s95
      %p106 = scmp.eq.s32.totalorder %s18, 0
      %p107 = por %p105, %p106
      %p108 = scmp.ne.s32.totalorder %s94, %s95
      %p109 = scmp.eq.s32.totalorder %s19, 1
      %p110 = por %p108, %p109
      %p112 = scmp.ne.s32.totalorder %s95, %s111
      %p113 = scmp.eq.s32.totalorder %s19, 0
      %p114 = por %p112, %p113
      %p115 = scmp.le.s32.totalorder 1, %s13
      %p116 = scmp.lt.s32.totalorder %s13, 3
      %p117 = pnand %p115, %p116
      %p118 = pneg %p117
      // Predicated region
      $region9: #{tpu_custom_call.1} parent=5 // pred_check
        _
      $region10: #{tpu_custom_call.1} parent=5 // pred_check_branch
        %120 = sbr.rel (%p117) target = $region12
      $region11: #{tpu_custom_call.1} parent=5 // pred_region
        %s121 = ssub.s32 %s13, 1
        // Predicated region
        $region13: #{tpu_custom_call.1} parent=11 // pred_check
          %p122 = pneg %p60
        $region14: #{tpu_custom_call.1} parent=11 // pred_check_branch
          %124 = sbr.rel (%p122) target = $region16
        $region15: #{tpu_custom_call.1} parent=11 // pred_region
          %s126 = ssub.s32 9216, 9216
          %127 = vsyncadd [#allocation3], %s126
          %s128 = sshll.u32 [#allocation2], 4
          %s129 = int_to_ptr.vmem [resolvable:$true] %s128
          %134 = dma.hbm_to_vmem [thread:$0]  %s1, 9216, %s129, [#allocation3], 64, 64, 4
        $region16: #{tpu_custom_call.1} parent=11 // pred_fallthru
          _
        // Predicated region
        $region17: #{tpu_custom_call.1} parent=11 // pred_check
          %p135 = pneg %p81
        $region18: #{tpu_custom_call.1} parent=11 // pred_check_branch
          %137 = sbr.rel (%p135) target = $region20
        $region19: #{tpu_custom_call.1} parent=11 // pred_region
          _
        $region20: #{tpu_custom_call.1} parent=11 // pred_fallthru
          _
      $region12: #{tpu_custom_call.1} parent=5 // pred_fallthru
        _
      %p138 = scmp.lt.s32.totalorder %s13, 2
      // Predicated region
      $region21: #{tpu_custom_call.1} parent=5 // pred_check
        %p139 = pneg %p138
      $region22: #{tpu_custom_call.1} parent=5 // pred_check_branch
        %141 = sbr.rel (%p139) target = $region24
      $region23: #{tpu_custom_call.1} parent=5 // pred_region
        // Predicated region
        $region25: #{tpu_custom_call.1} parent=23 // pred_check
          %p142 = pneg %p33
        $region26: #{tpu_custom_call.1} parent=23 // pred_check_branch
          %144 = sbr.rel (%p142) target = $region28
        $region27: #{tpu_custom_call.1} parent=23 // pred_region
          %p145 = scmp.lt.s32.totalorder %s13, 1
          %s146 = scalar_select %p145, %s13, 1
          %s147 = smul.addr %s146, 6
          %s148 = smul.addr %s147, 4
          %s149 = scalar_lea.vmem %s0, %s148
        $region28: #{tpu_custom_call.1} parent=23 // pred_fallthru
          _
      $region24: #{tpu_custom_call.1} parent=5 // pred_fallthru
        _
      %p150 = scmp.le.s32.totalorder 1, %s13
      %p151 = scmp.lt.s32.totalorder %s13, 3
      %p152 = pnand %p150, %p151
      %p153 = pneg %p152
      // Predicated region
      $region29: #{tpu_custom_call.1} parent=5 // pred_check
        _
      $region30: #{tpu_custom_call.1} parent=5 // pred_check_branch
        %155 = sbr.rel (%p152) target = $region32
      $region31: #{tpu_custom_call.1} parent=5 // pred_region
        %s156 = ssub.s32 %s13, 1
        // Predicated region
        $region33: #{tpu_custom_call.1} parent=31 // pred_check
          %p157 = pneg %p60
        $region34: #{tpu_custom_call.1} parent=31 // pred_check_branch
          %159 = sbr.rel (%p157) target = $region36
        $region35: #{tpu_custom_call.1} parent=31 // pred_region
          %160 = dma.done [#allocation3], 9216
        $region36: #{tpu_custom_call.1} parent=31 // pred_fallthru
          _
        %p161 = scmp.lt.s32.totalorder %s18, 1
        %s162 = scalar_select %p161, %s18, 1
        %s163 = smul.addr %s162, 6
        %s164 = smul.addr %s163, 4
        %s165 = scalar_lea.vmem %s0, %s164
        %p166 = pneg %p39
        %p167 = pneg %p36
        %p168 = pneg %p60
        %p169 = pneg %p57
        %p170 = pneg %p81
        %p171 = pneg %p78
        %p172 = pneg %p107
        %p173 = pneg %p104
        %s174 = sand.u32 %s94, 1
        %s175 = scalar_lea.sflag [#allocation4], %s174
        %s176 = sand.u32 %s94, 1
        %s177 = smul.addr %s176, 16
        %s178 = scalar_lea.vmem [#allocation5], %s177
        %p179 = scmp.lt.s32.totalorder %s18, 1
        %s180 = scalar_select %p179, %s18, 1
        %s181 = smul.addr %s180, 6
        %s182 = smul.addr %s181, 4
        %s183 = scalar_lea.vmem %s0, %s182
        %v185 = vld [vmem:[#allocation2] sm:$0xf]
        %v186 = vld [vmem:[#allocation2 + $0x4] sm:$0xf]
        %v187 = vld [vmem:[#allocation2 + $0x8] sm:$0xf]
        %v188 = vld [vmem:[#allocation2 + $0xc] sm:$0xf]
        %v189 = vld [vmem:[#allocation2 + $0x10] sm:$0xf]
        %v190 = vld [vmem:[#allocation2 + $0x14] sm:$0xf]
        %v191 = vld [vmem:[#allocation2 + $0x18] sm:$0xf]
        %v192 = vld [vmem:[#allocation2 + $0x1c] sm:$0xf]
        %v193 = vld [vmem:[#allocation2 + $0x20] sm:$0xf]
        %v194 = vld [vmem:[#allocation2 + $0x24] sm:$0xf]
        %v195 = vld [vmem:[#allocation2 + $0x28] sm:$0xf]
        %v196 = vld [vmem:[#allocation2 + $0x2c] sm:$0xf]
        %v197 = vld [vmem:[#allocation2 + $0x30] sm:$0xf]
        %v198 = vld [vmem:[#allocation2 + $0x34] sm:$0xf]
        %v199 = vld [vmem:[#allocation2 + $0x38] sm:$0xf]
        %v200 = vld [vmem:[#allocation2 + $0x3c] sm:$0xf]
        %v201 = vld [vmem:[#allocation2 + $0x40] sm:$0xf]
        %v202 = vld [vmem:[#allocation2 + $0x44] sm:$0xf]
        %v203 = vld [vmem:[#allocation2 + $0x48] sm:$0xf]
        %v204 = vld [vmem:[#allocation2 + $0x4c] sm:$0xf]
        %v205 = vld [vmem:[#allocation2 + $0x50] sm:$0xf]
        %v206 = vld [vmem:[#allocation2 + $0x54] sm:$0xf]
        %v207 = vld [vmem:[#allocation2 + $0x58] sm:$0xf]
        %v208 = vld [vmem:[#allocation2 + $0x5c] sm:$0xf]
        %v209 = vld [vmem:[#allocation2 + $0x60] sm:$0xf]
        %v210 = vld [vmem:[#allocation2 + $0x64] sm:$0xf]
        %v211 = vld [vmem:[#allocation2 + $0x68] sm:$0xf]
        %v212 = vld [vmem:[#allocation2 + $0x6c] sm:$0xf]
        %v213 = vld [vmem:[#allocation2 + $0x70] sm:$0xf]
        %v214 = vld [vmem:[#allocation2 + $0x74] sm:$0xf]
        %v215 = vld [vmem:[#allocation2 + $0x78] sm:$0xf]
        %v216 = vld [vmem:[#allocation2 + $0x7c] sm:$0xf]
        %v217 = vld [vmem:[#allocation2 + $0x80] sm:$0xf]
        %v218 = vld [vmem:[#allocation2 + $0x84] sm:$0xf]
        %v219 = vld [vmem:[#allocation2 + $0x88] sm:$0xf]
        %v220 = vld [vmem:[#allocation2 + $0x8c] sm:$0xf]
        %v221 = vld [vmem:[#allocation2 + $0x90] sm:$0xf]
        %v222 = vld [vmem:[#allocation2 + $0x94] sm:$0xf]
        %v223 = vld [vmem:[#allocation2 + $0x98] sm:$0xf]
        %v224 = vld [vmem:[#allocation2 + $0x9c] sm:$0xf]
        %v225 = vld [vmem:[#allocation2 + $0xa0] sm:$0xf]
        %v226 = vld [vmem:[#allocation2 + $0xa4] sm:$0xf]
        %v227 = vld [vmem:[#allocation2 + $0xa8] sm:$0xf]
        %v228 = vld [vmem:[#allocation2 + $0xac] sm:$0xf]
        %v229 = vld [vmem:[#allocation2 + $0xb0] sm:$0xf]
        %v230 = vld [vmem:[#allocation2 + $0xb4] sm:$0xf]
        %v231 = vld [vmem:[#allocation2 + $0xb8] sm:$0xf]
        %v232 = vld [vmem:[#allocation2 + $0xbc] sm:$0xf]
        %v233 = vld [vmem:[#allocation2 + $0xc0] sm:$0xf]
        %v234 = vld [vmem:[#allocation2 + $0xc4] sm:$0xf]
        %v235 = vld [vmem:[#allocation2 + $0xc8] sm:$0xf]
        %v236 = vld [vmem:[#allocation2 + $0xcc] sm:$0xf]
        %v237 = vld [vmem:[#allocation2 + $0xd0] sm:$0xf]
        %v238 = vld [vmem:[#allocation2 + $0xd4] sm:$0xf]
        %v239 = vld [vmem:[#allocation2 + $0xd8] sm:$0xf]
        %v240 = vld [vmem:[#allocation2 + $0xdc] sm:$0xf]
        %v241 = vld [vmem:[#allocation2 + $0xe0] sm:$0xf]
        %v242 = vld [vmem:[#allocation2 + $0xe4] sm:$0xf]
        %v243 = vld [vmem:[#allocation2 + $0xe8] sm:$0xf]
        %v244 = vld [vmem:[#allocation2 + $0xec] sm:$0xf]
        %v245 = vld [vmem:[#allocation2 + $0xf0] sm:$0xf]
        %v246 = vld [vmem:[#allocation2 + $0xf4] sm:$0xf]
        %v247 = vld [vmem:[#allocation2 + $0xf8] sm:$0xf]
        %v248 = vld [vmem:[#allocation2 + $0xfc] sm:$0xf]
        %v249 = vld [vmem:[#allocation2 + $0x100] sm:$0xf]
        %v250 = vld [vmem:[#allocation2 + $0x104] sm:$0xf]
        %v251 = vld [vmem:[#allocation2 + $0x108] sm:$0xf]
        %v252 = vld [vmem:[#allocation2 + $0x10c] sm:$0xf]
        %v253 = vld [vmem:[#allocation2 + $0x110] sm:$0xf]
        %v254 = vld [vmem:[#allocation2 + $0x114] sm:$0xf]
        %v255 = vld [vmem:[#allocation2 + $0x118] sm:$0xf]
        %v256 = vld [vmem:[#allocation2 + $0x11c] sm:$0xf]
        %v257 = vld [vmem:[#allocation2 + $0x120] sm:$0xf]
        %v258 = vld [vmem:[#allocation2 + $0x124] sm:$0xf]
        %v259 = vld [vmem:[#allocation2 + $0x128] sm:$0xf]
        %v260 = vld [vmem:[#allocation2 + $0x12c] sm:$0xf]
        %v261 = vld [vmem:[#allocation2 + $0x130] sm:$0xf]
        %v262 = vld [vmem:[#allocation2 + $0x134] sm:$0xf]
        %v263 = vld [vmem:[#allocation2 + $0x138] sm:$0xf]
        %v264 = vld [vmem:[#allocation2 + $0x13c] sm:$0xf]
        %v265 = vld [vmem:[#allocation2 + $0x140] sm:$0xf]
        %v266 = vld [vmem:[#allocation2 + $0x144] sm:$0xf]
        %v267 = vld [vmem:[#allocation2 + $0x148] sm:$0xf]
        %v268 = vld [vmem:[#allocation2 + $0x14c] sm:$0xf]
        %v269 = vld [vmem:[#allocation2 + $0x150] sm:$0xf]
        %v270 = vld [vmem:[#allocation2 + $0x154] sm:$0xf]
        %v271 = vld [vmem:[#allocation2 + $0x158] sm:$0xf]
        %v272 = vld [vmem:[#allocation2 + $0x15c] sm:$0xf]
        %v273 = vld [vmem:[#allocation2 + $0x160] sm:$0xf]
        %v274 = vld [vmem:[#allocation2 + $0x164] sm:$0xf]
        %v275 = vld [vmem:[#allocation2 + $0x168] sm:$0xf]
        %v276 = vld [vmem:[#allocation2 + $0x16c] sm:$0xf]
        %v277 = vld [vmem:[#allocation2 + $0x170] sm:$0xf]
        %v278 = vld [vmem:[#allocation2 + $0x174] sm:$0xf]
        %v279 = vld [vmem:[#allocation2 + $0x178] sm:$0xf]
        %v280 = vld [vmem:[#allocation2 + $0x17c] sm:$0xf]
        %v281 = vld [vmem:[#allocation2 + $0x180] sm:$0xf]
        %v282 = vld [vmem:[#allocation2 + $0x184] sm:$0xf]
        %v283 = vld [vmem:[#allocation2 + $0x188] sm:$0xf]
        %v284 = vld [vmem:[#allocation2 + $0x18c] sm:$0xf]
        %v285 = vld [vmem:[#allocation2 + $0x190] sm:$0xf]
        %v286 = vld [vmem:[#allocation2 + $0x194] sm:$0xf]
        %v287 = vld [vmem:[#allocation2 + $0x198] sm:$0xf]
        %v288 = vld [vmem:[#allocation2 + $0x19c] sm:$0xf]
        %v289 = vld [vmem:[#allocation2 + $0x1a0] sm:$0xf]
        %v290 = vld [vmem:[#allocation2 + $0x1a4] sm:$0xf]
        %v291 = vld [vmem:[#allocation2 + $0x1a8] sm:$0xf]
        %v292 = vld [vmem:[#allocation2 + $0x1ac] sm:$0xf]
        %v293 = vld [vmem:[#allocation2 + $0x1b0] sm:$0xf]
        %v294 = vld [vmem:[#allocation2 + $0x1b4] sm:$0xf]
        %v295 = vld [vmem:[#allocation2 + $0x1b8] sm:$0xf]
        %v296 = vld [vmem:[#allocation2 + $0x1bc] sm:$0xf]
        %v297 = vld [vmem:[#allocation2 + $0x1c0] sm:$0xf]
        %v298 = vld [vmem:[#allocation2 + $0x1c4] sm:$0xf]
        %v299 = vld [vmem:[#allocation2 + $0x1c8] sm:$0xf]
        %v300 = vld [vmem:[#allocation2 + $0x1cc] sm:$0xf]
        %v301 = vld [vmem:[#allocation2 + $0x1d0] sm:$0xf]
        %v302 = vld [vmem:[#allocation2 + $0x1d4] sm:$0xf]
        %v303 = vld [vmem:[#allocation2 + $0x1d8] sm:$0xf]
        %v304 = vld [vmem:[#allocation2 + $0x1dc] sm:$0xf]
        %v305 = vld [vmem:[#allocation2 + $0x1e0] sm:$0xf]
        %v306 = vld [vmem:[#allocation2 + $0x1e4] sm:$0xf]
        %v307 = vld [vmem:[#allocation2 + $0x1e8] sm:$0xf]
        %v308 = vld [vmem:[#allocation2 + $0x1ec] sm:$0xf]
        %v309 = vld [vmem:[#allocation2 + $0x1f0] sm:$0xf]
        %v310 = vld [vmem:[#allocation2 + $0x1f4] sm:$0xf]
        %v311 = vld [vmem:[#allocation2 + $0x1f8] sm:$0xf]
        %v312 = vld [vmem:[#allocation2 + $0x1fc] sm:$0xf]
        %v313 = vld [vmem:[#allocation2 + $0x200] sm:$0xf]
        %v314 = vld [vmem:[#allocation2 + $0x204] sm:$0xf]
        %v315 = vld [vmem:[#allocation2 + $0x208] sm:$0xf]
        %v316 = vld [vmem:[#allocation2 + $0x20c] sm:$0xf]
        %v317 = vld [vmem:[#allocation2 + $0x210] sm:$0xf]
        %v318 = vld [vmem:[#allocation2 + $0x214] sm:$0xf]
        %v319 = vld [vmem:[#allocation2 + $0x218] sm:$0xf]
        %v320 = vld [vmem:[#allocation2 + $0x21c] sm:$0xf]
        %v321 = vld [vmem:[#allocation2 + $0x220] sm:$0xf]
        %v322 = vld [vmem:[#allocation2 + $0x224] sm:$0xf]
        %v323 = vld [vmem:[#allocation2 + $0x228] sm:$0xf]
        %v324 = vld [vmem:[#allocation2 + $0x22c] sm:$0xf]
        %v325 = vld [vmem:[#allocation2 + $0x230] sm:$0xf]
        %v326 = vld [vmem:[#allocation2 + $0x234] sm:$0xf]
        %v327 = vld [vmem:[#allocation2 + $0x238] sm:$0xf]
        %v328 = vld [vmem:[#allocation2 + $0x23c] sm:$0xf]
        %v329 = vld [vmem:[%s2] sm:$0x1]
        %v330 = vld [vmem:[%s183] sm:$0xff]
        %v331 = vld [vmem:[%s183 + $0x8] sm:$0xff]
        %v332 = vld [vmem:[%s183 + $0x10] sm:$0x11]
        %v333 = vunpack.c.l.bf16 %v330
        %v334 = vunpack.c.h.bf16 %v330
        %v335 = vunpack.c.l.bf16 %v331
        %v336 = vunpack.c.h.bf16 %v331
        %v337 = vunpack.c.l.bf16 %v332
        %v338 = vunpack.c.h.bf16 %v332
        %343 = vrot.lane.b32.xlu0 %v333, 120
        %v344 = vpop.permute.xlu0 %343
        %345 = vrot.lane.b32.xlu0 %v334, 120
        %v346 = vpop.permute.xlu0 %345
        %347 = vrot.lane.b32.xlu0 %v335, 120
        %v348 = vpop.permute.xlu0 %347
        %349 = vrot.lane.b32.xlu0 %v336, 120
        %v350 = vpop.permute.xlu0 %349
        %vm351 = vcmask 982016
        %v352 = vsel %vm351, %v344, %v346
        %v353 = vsel %vm351, %v348, %v350
        %356 = vrot.lane.b32.xlu0 %v333, 112
        %v357 = vpop.permute.xlu0 %356
        %358 = vrot.lane.b32.xlu0 %v334, 112
        %v359 = vpop.permute.xlu0 %358
        %360 = vrot.lane.b32.xlu0 %v335, 112
        %v361 = vpop.permute.xlu0 %360
        %362 = vrot.lane.b32.xlu0 %v336, 112
        %v363 = vpop.permute.xlu0 %362
        %vm364 = vcmask 916480
        %v365 = vsel %vm364, %v357, %v359
        %v366 = vsel %vm364, %v361, %v363
        %vm370 = vcmask 1046528
        %v371 = vrot.slane %v333, 1
        %v372 = vrot.slane %v335, 1
        %v373 = vsel %vm370, %v371, %v372
        %v374 = vrot.slane %v337, 1
        %v375 = vsel %vm370, %v372, %v374
        %v379 = vrot.slane %v334, 1
        %v380 = vrot.slane %v336, 1
        %v381 = vsel %vm370, %v379, %v380
        %v382 = vrot.slane %v338, 1
        %v383 = vsel %vm370, %v380, %v382
        %384 = vrot.lane.b32.xlu0 %v373, 120
        %v385 = vpop.permute.xlu0 %384
        %386 = vrot.lane.b32.xlu0 %v381, 120
        %v387 = vpop.permute.xlu0 %386
        %388 = vrot.lane.b32.xlu0 %v375, 120
        %v389 = vpop.permute.xlu0 %388
        %390 = vrot.lane.b32.xlu0 %v383, 120
        %v391 = vpop.permute.xlu0 %390
        %v392 = vsel %vm351, %v385, %v387
        %v393 = vsel %vm351, %v389, %v391
        %396 = vrot.lane.b32.xlu0 %v373, 112
        %v397 = vpop.permute.xlu0 %396
        %398 = vrot.lane.b32.xlu0 %v381, 112
        %v399 = vpop.permute.xlu0 %398
        %400 = vrot.lane.b32.xlu0 %v375, 112
        %v401 = vpop.permute.xlu0 %400
        %402 = vrot.lane.b32.xlu0 %v383, 112
        %v403 = vpop.permute.xlu0 %402
        %v404 = vsel %vm364, %v397, %v399
        %v405 = vsel %vm364, %v401, %v403
        %vm408 = vcmask 1045504
        %v409 = vrot.slane %v333, 2
        %v410 = vrot.slane %v335, 2
        %v411 = vsel %vm408, %v409, %v410
        %v412 = vrot.slane %v337, 2
        %v413 = vsel %vm408, %v410, %v412
        %v416 = vrot.slane %v334, 2
        %v417 = vrot.slane %v336, 2
        %v418 = vsel %vm408, %v416, %v417
        %v419 = vrot.slane %v338, 2
        %v420 = vsel %vm408, %v417, %v419
        %421 = vrot.lane.b32.xlu0 %v411, 120
        %v422 = vpop.permute.xlu0 %421
        %423 = vrot.lane.b32.xlu0 %v418, 120
        %v424 = vpop.permute.xlu0 %423
        %425 = vrot.lane.b32.xlu0 %v413, 120
        %v426 = vpop.permute.xlu0 %425
        %427 = vrot.lane.b32.xlu0 %v420, 120
        %v428 = vpop.permute.xlu0 %427
        %v429 = vsel %vm351, %v422, %v424
        %v430 = vsel %vm351, %v426, %v428
        %433 = vrot.lane.b32.xlu0 %v411, 112
        %v434 = vpop.permute.xlu0 %433
        %435 = vrot.lane.b32.xlu0 %v418, 112
        %v436 = vpop.permute.xlu0 %435
        %437 = vrot.lane.b32.xlu0 %v413, 112
        %v438 = vpop.permute.xlu0 %437
        %439 = vrot.lane.b32.xlu0 %v420, 112
        %v440 = vpop.permute.xlu0 %439
        %v441 = vsel %vm364, %v434, %v436
        %v442 = vsel %vm364, %v438, %v440
        %v445 = vpack.c.bf16 %v335, %v333
        %v446 = vpack.c.bf16 %v353, %v352
        %v447 = vpack.c.bf16 %v366, %v365
        %v448 = vpack.c.bf16 %v375, %v373
        %v449 = vpack.c.bf16 %v393, %v392
        %v450 = vpack.c.bf16 %v405, %v404
        %v451 = vpack.c.bf16 %v413, %v411
        %v452 = vpack.c.bf16 %v430, %v429
        %v453 = vpack.c.bf16 %v442, %v441
        %v455 = vlaneseq
        %v456 = vshrl.u32 %v455, 7
        %v457 = vsub.s32 0, %v456
        %v458 = vrot.slane %v329, %v457
        %v604 = vunpack.c.l.b16 %v185
        %v605 = vunpack.c.l.b16 %v186
        %v606 = vunpack.c.l.b16 %v187
        %v607 = vunpack.c.l.b16 %v188
        %v608 = vunpack.c.l.b16 %v189
        %v609 = vunpack.c.l.b16 %v190
        %v610 = vunpack.c.l.b16 %v191
        %v611 = vunpack.c.l.b16 %v192
        %v612 = vunpack.c.l.b16 %v193
        %v613 = vunpack.c.l.b16 %v194
        %v614 = vunpack.c.l.b16 %v195
        %v615 = vunpack.c.l.b16 %v196
        %v616 = vunpack.c.l.b16 %v197
        %v617 = vunpack.c.l.b16 %v198
        %v618 = vunpack.c.l.b16 %v199
        %v619 = vunpack.c.l.b16 %v200
        %v620 = vunpack.c.l.b16 %v201
        %v621 = vunpack.c.l.b16 %v202
        %v622 = vunpack.c.l.b16 %v203
        %v623 = vunpack.c.l.b16 %v204
        %v624 = vunpack.c.l.b16 %v205
        %v625 = vunpack.c.l.b16 %v206
        %v626 = vunpack.c.l.b16 %v207
        %v627 = vunpack.c.l.b16 %v208
        %v628 = vunpack.c.l.b16 %v209
        %v629 = vunpack.c.l.b16 %v210
        %v630 = vunpack.c.l.b16 %v211
        %v631 = vunpack.c.l.b16 %v212
        %v632 = vunpack.c.l.b16 %v213
        %v633 = vunpack.c.l.b16 %v214
        %v634 = vunpack.c.l.b16 %v215
        %v635 = vunpack.c.l.b16 %v216
        %v636 = vunpack.c.l.b16 %v217
        %v637 = vunpack.c.l.b16 %v218
        %v638 = vunpack.c.l.b16 %v219
        %v639 = vunpack.c.l.b16 %v220
        %v640 = vunpack.c.l.b16 %v221
        %v641 = vunpack.c.l.b16 %v222
        %v642 = vunpack.c.l.b16 %v223
        %v643 = vunpack.c.l.b16 %v224
        %v644 = vunpack.c.l.b16 %v225
        %v645 = vunpack.c.l.b16 %v226
        %v646 = vunpack.c.l.b16 %v227
        %v647 = vunpack.c.l.b16 %v228
        %v648 = vunpack.c.l.b16 %v229
        %v649 = vunpack.c.l.b16 %v230
        %v650 = vunpack.c.l.b16 %v231
        %v651 = vunpack.c.l.b16 %v232
        %v652 = vunpack.c.l.b16 %v233
        %v653 = vunpack.c.l.b16 %v234
        %v654 = vunpack.c.l.b16 %v235
        %v655 = vunpack.c.l.b16 %v236
        %v656 = vunpack.c.l.b16 %v237
        %v657 = vunpack.c.l.b16 %v238
        %v658 = vunpack.c.l.b16 %v239
        %v659 = vunpack.c.l.b16 %v240
        %v660 = vunpack.c.l.b16 %v241
        %v661 = vunpack.c.l.b16 %v242
        %v662 = vunpack.c.l.b16 %v243
        %v663 = vunpack.c.l.b16 %v244
        %v664 = vunpack.c.l.b16 %v245
        %v665 = vunpack.c.l.b16 %v246
        %v666 = vunpack.c.l.b16 %v247
        %v667 = vunpack.c.l.b16 %v248
        %v668 = vunpack.c.l.b16 %v249
        %v669 = vunpack.c.l.b16 %v250
        %v670 = vunpack.c.l.b16 %v251
        %v671 = vunpack.c.l.b16 %v252
        %v672 = vunpack.c.l.b16 %v253
        %v673 = vunpack.c.l.b16 %v254
        %v674 = vunpack.c.l.b16 %v255
        %v675 = vunpack.c.l.b16 %v256
        %v676 = vunpack.c.l.b16 %v257
        %v677 = vunpack.c.l.b16 %v258
        %v678 = vunpack.c.l.b16 %v259
        %v679 = vunpack.c.l.b16 %v260
        %v680 = vunpack.c.l.b16 %v261
        %v681 = vunpack.c.l.b16 %v262
        %v682 = vunpack.c.l.b16 %v263
        %v683 = vunpack.c.l.b16 %v264
        %v684 = vunpack.c.l.b16 %v265
        %v685 = vunpack.c.l.b16 %v266
        %v686 = vunpack.c.l.b16 %v267
        %v687 = vunpack.c.l.b16 %v268
        %v688 = vunpack.c.l.b16 %v269
        %v689 = vunpack.c.l.b16 %v270
        %v690 = vunpack.c.l.b16 %v271
        %v691 = vunpack.c.l.b16 %v272
        %v692 = vunpack.c.l.b16 %v273
        %v693 = vunpack.c.l.b16 %v274
        %v694 = vunpack.c.l.b16 %v275
        %v695 = vunpack.c.l.b16 %v276
        %v696 = vunpack.c.l.b16 %v277
        %v697 = vunpack.c.l.b16 %v278
        %v698 = vunpack.c.l.b16 %v279
        %v699 = vunpack.c.l.b16 %v280
        %v700 = vunpack.c.l.b16 %v281
        %v701 = vunpack.c.l.b16 %v282
        %v702 = vunpack.c.l.b16 %v283
        %v703 = vunpack.c.l.b16 %v284
        %v704 = vunpack.c.l.b16 %v285
        %v705 = vunpack.c.l.b16 %v286
        %v706 = vunpack.c.l.b16 %v287
        %v707 = vunpack.c.l.b16 %v288
        %v708 = vunpack.c.l.b16 %v289
        %v709 = vunpack.c.l.b16 %v290
        %v710 = vunpack.c.l.b16 %v291
        %v711 = vunpack.c.l.b16 %v292
        %v712 = vunpack.c.l.b16 %v293
        %v713 = vunpack.c.l.b16 %v294
        %v714 = vunpack.c.l.b16 %v295
        %v715 = vunpack.c.l.b16 %v296
        %v716 = vunpack.c.l.b16 %v297
        %v717 = vunpack.c.l.b16 %v298
        %v718 = vunpack.c.l.b16 %v299
        %v719 = vunpack.c.l.b16 %v300
        %v720 = vunpack.c.l.b16 %v301
        %v721 = vunpack.c.l.b16 %v302
        %v722 = vunpack.c.l.b16 %v303
        %v723 = vunpack.c.l.b16 %v304
        %v724 = vunpack.c.l.b16 %v305
        %v725 = vunpack.c.l.b16 %v306
        %v726 = vunpack.c.l.b16 %v307
        %v727 = vunpack.c.l.b16 %v308
        %v728 = vunpack.c.l.b16 %v309
        %v729 = vunpack.c.l.b16 %v310
        %v730 = vunpack.c.l.b16 %v311
        %v731 = vunpack.c.l.b16 %v312
        %v732 = vunpack.c.l.b16 %v313
        %v733 = vunpack.c.l.b16 %v314
        %v734 = vunpack.c.l.b16 %v315
        %v735 = vunpack.c.l.b16 %v316
        %v736 = vunpack.c.l.b16 %v317
        %v737 = vunpack.c.l.b16 %v318
        %v738 = vunpack.c.l.b16 %v319
        %v739 = vunpack.c.l.b16 %v320
        %v740 = vunpack.c.l.b16 %v321
        %v741 = vunpack.c.l.b16 %v322
        %v742 = vunpack.c.l.b16 %v323
        %v743 = vunpack.c.l.b16 %v324
        %v744 = vunpack.c.l.b16 %v325
        %v745 = vunpack.c.l.b16 %v326
        %v746 = vunpack.c.l.b16 %v327
        %v747 = vunpack.c.l.b16 %v328
        %v748 = vpack.c.b16 %v605, %v604
        %v749 = vpack.c.b16 %v607, %v606
        %v750 = vpack.c.b16 %v609, %v608
        %v751 = vpack.c.b16 %v611, %v610
        %v752 = vpack.c.b16 %v613, %v612
        %v753 = vpack.c.b16 %v615, %v614
        %v754 = vpack.c.b16 %v617, %v616
        %v755 = vpack.c.b16 %v619, %v618
        %v756 = vpack.c.b16 %v621, %v620
        %v757 = vpack.c.b16 %v623, %v622
        %v758 = vpack.c.b16 %v625, %v624
        %v759 = vpack.c.b16 %v627, %v626
        %v760 = vpack.c.b16 %v629, %v628
        %v761 = vpack.c.b16 %v631, %v630
        %v762 = vpack.c.b16 %v633, %v632
        %v763 = vpack.c.b16 %v635, %v634
        %v764 = vpack.c.b16 %v637, %v636
        %v765 = vpack.c.b16 %v639, %v638
        %v766 = vpack.c.b16 %v641, %v640
        %v767 = vpack.c.b16 %v643, %v642
        %v768 = vpack.c.b16 %v645, %v644
        %v769 = vpack.c.b16 %v647, %v646
        %v770 = vpack.c.b16 %v649, %v648
        %v771 = vpack.c.b16 %v651, %v650
        %v772 = vpack.c.b16 %v653, %v652
        %v773 = vpack.c.b16 %v655, %v654
        %v774 = vpack.c.b16 %v657, %v656
        %v775 = vpack.c.b16 %v659, %v658
        %v776 = vpack.c.b16 %v661, %v660
        %v777 = vpack.c.b16 %v663, %v662
        %v778 = vpack.c.b16 %v665, %v664
        %v779 = vpack.c.b16 %v667, %v666
        %v780 = vpack.c.b16 %v669, %v668
        %v781 = vpack.c.b16 %v671, %v670
        %v782 = vpack.c.b16 %v673, %v672
        %v783 = vpack.c.b16 %v675, %v674
        %v784 = vpack.c.b16 %v677, %v676
        %v785 = vpack.c.b16 %v679, %v678
        %v786 = vpack.c.b16 %v681, %v680
        %v787 = vpack.c.b16 %v683, %v682
        %v788 = vpack.c.b16 %v685, %v684
        %v789 = vpack.c.b16 %v687, %v686
        %v790 = vpack.c.b16 %v689, %v688
        %v791 = vpack.c.b16 %v691, %v690
        %v792 = vpack.c.b16 %v693, %v692
        %v793 = vpack.c.b16 %v695, %v694
        %v794 = vpack.c.b16 %v697, %v696
        %v795 = vpack.c.b16 %v699, %v698
        %v796 = vpack.c.b16 %v701, %v700
        %v797 = vpack.c.b16 %v703, %v702
        %v798 = vpack.c.b16 %v705, %v704
        %v799 = vpack.c.b16 %v707, %v706
        %v800 = vpack.c.b16 %v709, %v708
        %v801 = vpack.c.b16 %v711, %v710
        %v802 = vpack.c.b16 %v713, %v712
        %v803 = vpack.c.b16 %v715, %v714
        %v804 = vpack.c.b16 %v717, %v716
        %v805 = vpack.c.b16 %v719, %v718
        %v806 = vpack.c.b16 %v721, %v720
        %v807 = vpack.c.b16 %v723, %v722
        %v808 = vpack.c.b16 %v725, %v724
        %v809 = vpack.c.b16 %v727, %v726
        %v810 = vpack.c.b16 %v729, %v728
        %v811 = vpack.c.b16 %v731, %v730
        %v812 = vpack.c.b16 %v733, %v732
        %v813 = vpack.c.b16 %v735, %v734
        %v814 = vpack.c.b16 %v737, %v736
        %v815 = vpack.c.b16 %v739, %v738
        %v816 = vpack.c.b16 %v741, %v740
        %v817 = vpack.c.b16 %v743, %v742
        %v818 = vpack.c.b16 %v745, %v744
        %v819 = vpack.c.b16 %v747, %v746
        %892 = vmatprep.subr.bf16.mxu0 0
        %893 = vmatpush1.bf16.msra.mxu0 %v748
        %894 = vmatprep.subr.bf16.mxu0 0
        %895 = vmatpush1.bf16.msra.mxu0 %v749
        %896 = vmatprep.subr.bf16.mxu0 0
        %897 = vmatpush1.bf16.msra.mxu0 %v750
        %898 = vmatprep.subr.bf16.mxu0 0
        %899 = vmatpush1.bf16.msra.mxu0 %v751
        %900 = vmatprep.subr.bf16.mxu0 0
        %901 = vmatpush1.bf16.msra.mxu0 %v752
        %902 = vmatprep.subr.bf16.mxu0 0
        %903 = vmatpush1.bf16.msra.mxu0 %v753
        %904 = vmatprep.subr.bf16.mxu0 0
        %905 = vmatpush1.bf16.msra.mxu0 %v754
        %906 = vmatprep.subr.bf16.mxu0 0
        %907 = vmatpush1.bf16.msra.mxu0 %v755
        %908 = vmatprep.subr.bf16.mxu0 0
        %909 = vmatpush1.bf16.msra.mxu0 %v756
        %910 = vmatprep.subr.bf16.mxu0 0
        %911 = vmatpush1.bf16.msra.mxu0 %v757
        %912 = vmatprep.subr.bf16.mxu0 0
        %913 = vmatpush1.bf16.msra.mxu0 %v758
        %914 = vmatprep.subr.bf16.mxu0 0
        %915 = vmatpush1.bf16.msra.mxu0 %v759
        %916 = vmatprep.subr.bf16.mxu0 0
        %917 = vmatpush1.bf16.msra.mxu0 %v760
        %918 = vmatprep.subr.bf16.mxu0 0
        %919 = vmatpush1.bf16.msra.mxu0 %v761
        %920 = vmatprep.subr.bf16.mxu0 0
        %921 = vmatpush1.bf16.msra.mxu0 %v762
        %922 = vmatprep.subr.bf16.mxu0 0
        %923 = vmatpush1.bf16.msra.mxu0 %v763
        %924 = vmatprep.mubr.bf16.mxu0 %v446
        %925 = vmatmul.mubr.bf16.gmra.mrb[0].mxu0 %v445
        %v926 = vpop.f32.mrb[0].mxu0
        %v927 = vadd.f32 %v458, %v926
        %v928 = vpop.f32.mrb[0].mxu0
        %v929 = vpop.f32.mrb[0].mxu0
        %v930 = vadd.f32 %v458, %v929
        %v931 = vpop.f32.mrb[0].mxu0
        %932 = vdwg.mxu0
        %933 = vmatprep.subr.bf16.mxu0 0
        %934 = vmatpush1.bf16.msra.mxu0 %v764
        %935 = vmatprep.subr.bf16.mxu0 0
        %936 = vmatpush1.bf16.msra.mxu0 %v765
        %937 = vmatprep.subr.bf16.mxu0 0
        %938 = vmatpush1.bf16.msra.mxu0 %v766
        %939 = vmatprep.subr.bf16.mxu0 0
        %940 = vmatpush1.bf16.msra.mxu0 %v767
        %941 = vmatprep.subr.bf16.mxu0 0
        %942 = vmatpush1.bf16.msra.mxu0 %v768
        %943 = vmatprep.subr.bf16.mxu0 0
        %944 = vmatpush1.bf16.msra.mxu0 %v769
        %945 = vmatprep.subr.bf16.mxu0 0
        %946 = vmatpush1.bf16.msra.mxu0 %v770
        %947 = vmatprep.subr.bf16.mxu0 0
        %948 = vmatpush1.bf16.msra.mxu0 %v771
        %949 = vmatprep.subr.bf16.mxu0 0
        %950 = vmatpush1.bf16.msra.mxu0 %v772
        %951 = vmatprep.subr.bf16.mxu0 0
        %952 = vmatpush1.bf16.msra.mxu0 %v773
        %953 = vmatprep.subr.bf16.mxu0 0
        %954 = vmatpush1.bf16.msra.mxu0 %v774
        %955 = vmatprep.subr.bf16.mxu0 0
        %956 = vmatpush1.bf16.msra.mxu0 %v775
        %957 = vmatprep.subr.bf16.mxu0 0
        %958 = vmatpush1.bf16.msra.mxu0 %v776
        %959 = vmatprep.subr.bf16.mxu0 0
        %960 = vmatpush1.bf16.msra.mxu0 %v777
        %961 = vmatprep.subr.bf16.mxu0 0
        %962 = vmatpush1.bf16.msra.mxu0 %v778
        %963 = vmatprep.subr.bf16.mxu0 0
        %964 = vmatpush1.bf16.msra.mxu0 %v779
        %965 = vmatprep.mubr.bf16.mxu0 %v448
        %966 = vmatmul.mubr.bf16.gmra.mrb[0].mxu0 %v447
        %v967 = vpop.f32.mrb[0].mxu0
        %v968 = vadd.f32 %v927, %v967
        %v969 = vpop.f32.mrb[0].mxu0
        %v970 = vpop.f32.mrb[0].mxu0
        %v971 = vadd.f32 %v930, %v970
        %v972 = vpop.f32.mrb[0].mxu0
        %973 = vdwg.mxu0
        %974 = vmatprep.subr.bf16.mxu0 0
        %975 = vmatpush1.bf16.msra.mxu0 %v780
        %976 = vmatprep.subr.bf16.mxu0 0
        %977 = vmatpush1.bf16.msra.mxu0 %v781
        %978 = vmatprep.subr.bf16.mxu0 0
        %979 = vmatpush1.bf16.msra.mxu0 %v782
        %980 = vmatprep.subr.bf16.mxu0 0
        %981 = vmatpush1.bf16.msra.mxu0 %v783
        %982 = vmatprep.subr.bf16.mxu0 0
        %983 = vmatpush1.bf16.msra.mxu0 %v784
        %984 = vmatprep.subr.bf16.mxu0 0
        %985 = vmatpush1.bf16.msra.mxu0 %v785
        %986 = vmatprep.subr.bf16.mxu0 0
        %987 = vmatpush1.bf16.msra.mxu0 %v786
        %988 = vmatprep.subr.bf16.mxu0 0
        %989 = vmatpush1.bf16.msra.mxu0 %v787
        %990 = vmatprep.subr.bf16.mxu0 0
        %991 = vmatpush1.bf16.msra.mxu0 %v788
        %992 = vmatprep.subr.bf16.mxu0 0
        %993 = vmatpush1.bf16.msra.mxu0 %v789
        %994 = vmatprep.subr.bf16.mxu0 0
        %995 = vmatpush1.bf16.msra.mxu0 %v790
        %996 = vmatprep.subr.bf16.mxu0 0
        %997 = vmatpush1.bf16.msra.mxu0 %v791
        %998 = vmatprep.subr.bf16.mxu0 0
        %999 = vmatpush1.bf16.msra.mxu0 %v792
        %1000 = vmatprep.subr.bf16.mxu0 0
        %1001 = vmatpush1.bf16.msra.mxu0 %v793
        %1002 = vmatprep.subr.bf16.mxu0 0
        %1003 = vmatpush1.bf16.msra.mxu0 %v794
        %1004 = vmatprep.subr.bf16.mxu0 0
        %1005 = vmatpush1.bf16.msra.mxu0 %v795
        %1006 = vmatprep.mubr.bf16.mxu0 %v450
        %1007 = vmatmul.mubr.bf16.gmra.mrb[0].mxu0 %v449
        %v1008 = vpop.f32.mrb[0].mxu0
        %v1009 = vadd.f32 %v968, %v1008
        %v1010 = vpop.f32.mrb[0].mxu0
        %v1011 = vpop.f32.mrb[0].mxu0
        %v1012 = vadd.f32 %v971, %v1011
        %v1013 = vpop.f32.mrb[0].mxu0
        %1014 = vdwg.mxu0
        %1015 = vmatprep.subr.bf16.mxu0 0
        %1016 = vmatpush1.bf16.msra.mxu0 %v796
        %1017 = vmatprep.subr.bf16.mxu0 0
        %1018 = vmatpush1.bf16.msra.mxu0 %v797
        %1019 = vmatprep.subr.bf16.mxu0 0
        %1020 = vmatpush1.bf16.msra.mxu0 %v798
        %1021 = vmatprep.subr.bf16.mxu0 0
        %1022 = vmatpush1.bf16.msra.mxu0 %v799
        %1023 = vmatprep.subr.bf16.mxu0 0
        %1024 = vmatpush1.bf16.msra.mxu0 %v800
        %1025 = vmatprep.subr.bf16.mxu0 0
        %1026 = vmatpush1.bf16.msra.mxu0 %v801
        %1027 = vmatprep.subr.bf16.mxu0 0
        %1028 = vmatpush1.bf16.msra.mxu0 %v802
        %1029 = vmatprep.subr.bf16.mxu0 0
        %1030 = vmatpush1.bf16.msra.mxu0 %v803
        %1031 = vmatprep.subr.bf16.mxu0 0
        %1032 = vmatpush1.bf16.msra.mxu0 %v804
        %1033 = vmatprep.subr.bf16.mxu0 0
        %1034 = vmatpush1.bf16.msra.mxu0 %v805
        %1035 = vmatprep.subr.bf16.mxu0 0
        %1036 = vmatpush1.bf16.msra.mxu0 %v806
        %1037 = vmatprep.subr.bf16.mxu0 0
        %1038 = vmatpush1.bf16.msra.mxu0 %v807
        %1039 = vmatprep.subr.bf16.mxu0 0
        %1040 = vmatpush1.bf16.msra.mxu0 %v808
        %1041 = vmatprep.subr.bf16.mxu0 0
        %1042 = vmatpush1.bf16.msra.mxu0 %v809
        %1043 = vmatprep.subr.bf16.mxu0 0
        %1044 = vmatpush1.bf16.msra.mxu0 %v810
        %1045 = vmatprep.subr.bf16.mxu0 0
        %1046 = vmatpush1.bf16.msra.mxu0 %v811
        %1047 = vmatprep.mubr.bf16.mxu0 %v452
        %1048 = vmatmul.mubr.bf16.gmra.mrb[0].mxu0 %v451
        %v1049 = vpop.f32.mrb[0].mxu0
        %v1050 = vadd.f32 %v1009, %v1049
        %v1051 = vpop.f32.mrb[0].mxu0
        %v1052 = vpop.f32.mrb[0].mxu0
        %v1053 = vadd.f32 %v1012, %v1052
        %v1054 = vpop.f32.mrb[0].mxu0
        %1055 = vdwg.mxu0
        %1056 = vmatprep.subr.bf16.mxu0 0
        %1057 = vmatpush1.bf16.msra.mxu0 %v812
        %1058 = vmatprep.subr.bf16.mxu0 0
        %1059 = vmatpush1.bf16.msra.mxu0 %v813
        %1060 = vmatprep.subr.bf16.mxu0 0
        %1061 = vmatpush1.bf16.msra.mxu0 %v814
        %1062 = vmatprep.subr.bf16.mxu0 0
        %1063 = vmatpush1.bf16.msra.mxu0 %v815
        %1064 = vmatprep.subr.bf16.mxu0 0
        %1065 = vmatpush1.bf16.msra.mxu0 %v816
        %1066 = vmatprep.subr.bf16.mxu0 0
        %1067 = vmatpush1.bf16.msra.mxu0 %v817
        %1068 = vmatprep.subr.bf16.mxu0 0
        %1069 = vmatpush1.bf16.msra.mxu0 %v818
        %1070 = vmatprep.subr.bf16.mxu0 0
        %1071 = vmatpush1.bf16.msra.mxu0 %v819
        %1072 = vmatprep.subr.bf16.mxu0 0
        %1073 = vmatpush1.bf16.msra.mxu0 0
        %1074 = vmatprep.subr.bf16.mxu0 0
        %1075 = vmatpush1.bf16.msra.mxu0 0
        %1076 = vmatprep.subr.bf16.mxu0 0
        %1077 = vmatpush1.bf16.msra.mxu0 0
        %1078 = vmatprep.subr.bf16.mxu0 0
        %1079 = vmatpush1.bf16.msra.mxu0 0
        %1080 = vmatprep.subr.bf16.mxu0 0
        %1081 = vmatpush1.bf16.msra.mxu0 0
        %1082 = vmatprep.subr.bf16.mxu0 0
        %1083 = vmatpush1.bf16.msra.mxu0 0
        %1084 = vmatprep.subr.bf16.mxu0 0
        %1085 = vmatpush1.bf16.msra.mxu0 0
        %1086 = vmatprep.subr.bf16.mxu0 0
        %1087 = vmatpush1.bf16.msra.mxu0 0
        %1088 = vmatprep.mubr.bf16.mxu0 0
        %1089 = vmatmul.mubr.bf16.gmra.mrb[0].mxu0 %v453
        %v1090 = vpop.f32.mrb[0].mxu0
        %v1091 = vadd.f32 %v1050, %v1090
        %v1092 = vpop.f32.mrb[0].mxu0
        %v1093 = vpop.f32.mrb[0].mxu0
        %v1094 = vadd.f32 %v1053, %v1093
        %v1095 = vpop.f32.mrb[0].mxu0
        %1096 = vdwg.mxu0
        %v1097 = vmax.f32 %v1091, 0.0
        %v1098 = vmax.f32 %v1094, 0.0
        %1099 = vst [vmem:[%s178] sm:$0xff] %v1097
        %1100 = vst [vmem:[%s178 + $0x8] sm:$0xff] %v1098
        %s1101 = sand.u32 %s94, 1
        %s1102 = scalar_lea.sflag [#allocation4], %s1101
        %s1103 = sand.u32 %s94, 1
        %s1104 = smul.addr %s1103, 16
        %s1105 = scalar_lea.vmem [#allocation5], %s1104
        // Predicated region
        $region37: #{tpu_custom_call.1} parent=31 // pred_check
          %p1106 = pneg %p104
        $region38: #{tpu_custom_call.1} parent=31 // pred_check_branch
          %1108 = sbr.rel (%p1106) target = $region40
        $region39: #{tpu_custom_call.1} parent=31 // pred_region
          %s1110 = ssub.s32 256, 256
          %1111 = vsyncadd %s1102, %s1110
          %s1112 = smul.addr %s18, 2
          %s1113 = smul.addr %s1112, 128
          %s1114 = scalar_lea.hbm %s3, %s1113
          %s1115 = sshll.u32 %s1105, 4
          %s1116 = int_to_ptr.vmem [resolvable:$true] %s1115
          %1121 = dma.vmem_to_hbm [thread:$0]  %s1116, 256, %s1114, %s1102, 128, 128, 8
        $region40: #{tpu_custom_call.1} parent=31 // pred_fallthru
          _
      $region32: #{tpu_custom_call.1} parent=5 // pred_fallthru
        _
      %p1122 = scmp.le.s32.totalorder 2, %s13
      // Predicated region
      $region41: #{tpu_custom_call.1} parent=5 // pred_check
        %p1123 = pneg %p1122
      $region42: #{tpu_custom_call.1} parent=5 // pred_check_branch
        %1125 = sbr.rel (%p1123) target = $region44
      $region43: #{tpu_custom_call.1} parent=5 // pred_region
        %s1126 = ssub.s32 %s13, 2
        // Predicated region
        $region45: #{tpu_custom_call.1} parent=43 // pred_check
          %p1127 = pneg %p110
        $region46: #{tpu_custom_call.1} parent=43 // pred_check_branch
          %1129 = sbr.rel (%p1127) target = $region48
        $region47: #{tpu_custom_call.1} parent=43 // pred_region
          %s1130 = sand.u32 %s95, 1
          %s1131 = scalar_lea.sflag [#allocation4], %s1130
          %s1132 = sand.u32 %s95, 1
          %s1133 = smul.addr %s1132, 16
          %s1134 = scalar_lea.vmem [#allocation5], %s1133
          %1135 = dma.done %s1131, 256
        $region48: #{tpu_custom_call.1} parent=43 // pred_fallthru
          _
      $region44: #{tpu_custom_call.1} parent=5 // pred_fallthru
        _
    $region6: #{tpu_custom_call.1} parent=1 // loop_footer
      %s17 = sadd.s32 1, %s13
    $region7: #{tpu_custom_call.1} parent=1 // loop_footer_branch
      %12 = sbr.rel target = $region3
    $region8: #{tpu_custom_call.1} parent=1 // loop_exit
      _
    %1136 = vsyncpa [#allocation3], 1
    %s1137 = scalar_lea.sflag [#allocation3], 1
    %1138 = vsyncpa %s1137, 1
    %1139 = vsyncpa [#allocation4], 1
    %s1140 = scalar_lea.sflag [#allocation4], 1
    %1141 = vsyncpa %s1140, 1

</llo_original>
